<compile_context>
chip_gen: v7x
topology: tpu7x:2x2x1
jax: 0.10.0
libtpu: 0.0.40
codegen_flags: <defaults>
</compile_context>

<pallas_src>
import functools

import numpy as np
import jax
import jax.numpy as jnp
from jax.experimental import pallas as pl
from jax.experimental.pallas import tpu as pltpu

NEG_SLOPE = 0.2
_NEG_BIG = -1e30


def _vmem_limit_bytes():
    """~80% of the physical per-core VMEM, leaving headroom for compiler scratch."""
    try:
        cap = int(pltpu.get_tpu_info().vmem_capacity_bytes)
        return max(32 * 1024 * 1024, min(int(cap * 0.8), 112 * 1024 * 1024))
    except Exception:
        return 48 * 1024 * 1024   # safe on every generation (incl. v7x 64 MiB)


def _spec(block_shape, index_map, *, single_buffered=False):
    """BlockSpec; resident (constant-index) inputs get a single VMEM buffer."""
    if single_buffered:
        try:
            return pl.BlockSpec(block_shape, index_map,
                                pipeline_mode=pl.Buffered(1))
        except TypeError:  # older jax without pipeline_mode -> default buffering
            pass
    return pl.BlockSpec(block_shape, index_map)


# --------------------------- kernel 1: projection ----------------------------
def _proj_kernel(x_ref, w_ref, attn_lr_ref, feat_ref, scores_ref):
    # (TM, Din) @ (Din, HF) on the MXU.
    feat = jnp.dot(x_ref[...], w_ref[...], preferred_element_type=jnp.float32)
    feat_ref[...] = feat
    # Fused attention scores: attn_lr is a block-diagonal (HF, 128) matrix so a
    # single matmul produces [el | er | 0-pad] per node with a lane-dense store.
    scores_ref[...] = jnp.dot(feat, attn_lr_ref[...],
                              preferred_element_type=jnp.float32)


# ------------- kernel 2: online edge softmax + aggregation (src-tiled) -------
def _attn_kernel(adj_ref, er_ref, elT_ref, feat_ref, bias_ref, out_ref,
                 m_sc, l_sc, acc_sc, *, num_heads):
    s = pl.program_id(1)

    @pl.when(s == 0)
    def _init():
        m_sc[...] = jnp.full_like(m_sc, _NEG_BIG)
        l_sc[...] = jnp.zeros_like(l_sc)
        acc_sc[...] = jnp.zeros_like(acc_sc)

    # Head-independent additive mask, built ONCE per (dst, src) tile.
    adj_f = adj_ref[...].astype(jnp.float32)               # int8 0/1 -> f32
    mask_add = jnp.where(adj_f > 0.0, 0.0, jnp.float32(_NEG_BIG))  # (TM, TS)

    er = er_ref[...]          # (TM, H)  dst term
    elT = elT_ref[...]        # (H, TS)  src term (pre-transposed in wrapper)

    for h in range(num_heads):
        # e[i, j] = el[j, h] + er[i, h] on every candidate edge j -> i
        e = er[:, h:h + 1] + elT[h:h + 1, :]                  # (TM, TS)
        e = jnp.maximum(e, jnp.float32(NEG_SLOPE) * e)        # LeakyReLU
        e = e + mask_add                                      # mask non-edges

        m_prev = m_sc[h]                                      # (TM, 1)
        m_new = jnp.maximum(m_prev, jnp.max(e, axis=1, keepdims=True))
        alpha = jnp.exp(m_prev - m_new)                       # (TM, 1)
        p = jnp.exp(e - m_new)                                # masked -> exact 0

        l_sc[h] = alpha * l_sc[h] + jnp.sum(p, axis=1, keepdims=True)
        # bf16 (or f32) operands, f32 accumulate on the MXU; feat_ref[h] is a
        # free leading-axis slice of the (H, TS, F) block.
        acc_sc[h] = alpha * acc_sc[h] + jnp.dot(
            p.astype(feat_ref.dtype), feat_ref[h],
            preferred_element_type=jnp.float32)
        m_sc[h] = m_new

    @pl.when(s == pl.num_programs(1) - 1)
    def _finalize():
        outs = []
        for h in range(num_heads):
            inv = pl.reciprocal(l_sc[h], approx=False)        # (TM, 1)
            outs.append(acc_sc[h] * inv)                      # (TM, F)
        # Single full-width lane-dense store + one bias broadcast.
        out_ref[...] = (jnp.concatenate(outs, axis=1)
                        + bias_ref[...]).astype(out_ref.dtype)


# --------------------------------- wrapper -----------------------------------
def gat_conv_pallas(x, w, attn_l, attn_r, adj, bias, *,
                    tile_m=256, tile_src=512, agg_dtype=jnp.bfloat16):
    """x:(N,Din) w:(Din,H*F) attn_l/r:(H,F) adj[dst,src]:(N,N) 0/1 bias:(H*F,)
    -> (N, H, F).  agg_dtype=float32 gives exact f32 parity with the reference;
    the default bfloat16 trades ~0.5% relative error for ~2x MXU throughput."""
    n, d_in = x.shape
    num_heads, out_feats = attn_l.shape
    hf = num_heads * out_feats
    assert w.shape == (d_in, hf)

    vmem_limit = _vmem_limit_bytes()

    # Block-diagonal [attn_l | attn_r] projector, padded to a lane-dense 128
    # wide matrix.  Built with jnp ops -> jit-safe with traced parameters.
    score_w = max(128, ((2 * num_heads + 127) // 128) * 128)
    eye = jnp.eye(num_heads, dtype=jnp.float32)
    a_l = (attn_l.astype(jnp.float32)[:, :, None] * eye[:, None, :]).reshape(hf, num_heads)
    a_r = (attn_r.astype(jnp.float32)[:, :, None] * eye[:, None, :]).reshape(hf, num_heads)
    attn_lr = jnp.pad(jnp.concatenate([a_l, a_r], axis=1),
                      ((0, 0), (0, score_w - 2 * num_heads)))
    bias2d = jnp.asarray(bias, jnp.float32).reshape(1, hf)

    tm = n if n <= tile_m else tile_m
    grid_m = pl.cdiv(n, tm)

    # ---- pass 1: feat = x @ W, scores = feat @ [attn_l | attn_r | 0] ----
    feat, scores = pl.pallas_call(
        _proj_kernel,
        out_shape=(jax.ShapeDtypeStruct((n, hf), jnp.float32),
                   jax.ShapeDtypeStruct((n, score_w), jnp.float32)),
        grid=(grid_m,),
        in_specs=[
            _spec((tm, d_in), lambda i: (i, 0)),
            _spec((d_in, hf), lambda i: (0, 0), single_buffered=True),
            _spec((hf, score_w), lambda i: (0, 0), single_buffered=True),
        ],
        out_specs=(pl.BlockSpec((tm, hf), lambda i: (i, 0)),
                   pl.BlockSpec((tm, score_w), lambda i: (i, 0))),
        compiler_params=pltpu.CompilerParams(
            dimension_semantics=("parallel",), vmem_limit_bytes=vmem_limit),
    )(x, w, attn_lr)

    # ---- one-time layout plumbing (wrapper-side XLA ops, not per grid step) --
    el_t = jnp.transpose(scores[:, :num_heads])                       # (H, N)
    er = scores[:, num_heads:2 * num_heads]                           # (N, H)
    # (H, N, F) so the per-head slice inside kernel 2 is a free leading index.
    feat_src = jnp.transpose(feat.reshape(n, num_heads, out_feats),
                             (1, 0, 2)).astype(agg_dtype)
    # int8 0/1 mask: half the HBM/VMEM traffic of bf16.
    # TODO(synk): weighted adjacency / edge_weight is not supported here; only
    # a 0/1 mask is honored (matches the default forward with edge_weight=None).
    adj_i8 = adj if adj.dtype == jnp.int8 else (adj != 0).astype(jnp.int8)

    ts = n if n <= tile_src else tile_src
    grid_s = pl.cdiv(n, ts)
    n_src = grid_s * ts
    if n_src != n:
        # Pad the src axis with zeros so ragged src tiles are explicitly masked.
        pad = n_src - n
        adj_i8 = jnp.pad(adj_i8, ((0, 0), (0, pad)))
        el_t = jnp.pad(el_t, ((0, 0), (0, pad)))
        feat_src = jnp.pad(feat_src, ((0, 0), (0, pad), (0, 0)))

    # ---- pass 2: dst-tiled x src-tiled online softmax + aggregation ----
    kernel2 = functools.partial(_attn_kernel, num_heads=num_heads)
    out = pl.pallas_call(
        kernel2,
        out_shape=jax.ShapeDtypeStruct((n, hf), jnp.float32),
        grid=(grid_m, grid_s),
        in_specs=[
            _spec((tm, ts), lambda i, s: (i, s)),                        # adj
            _spec((tm, num_heads), lambda i, s: (i, 0)),                 # er
            _spec((num_heads, ts), lambda i, s: (0, s)),                 # el^T
            _spec((num_heads, ts, out_feats), lambda i, s: (0, s, 0)),   # feat
            _spec((1, hf), lambda i, s: (0, 0), single_buffered=True),   # bias
        ],
        out_specs=pl.BlockSpec((tm, hf), lambda i, s: (i, 0)),
        scratch_shapes=[
            pltpu.VMEM((num_heads, tm, 1), jnp.float32),           # running max
            pltpu.VMEM((num_heads, tm, 1), jnp.float32),           # running sum
            pltpu.VMEM((num_heads, tm, out_feats), jnp.float32),   # accumulator
        ],
        compiler_params=pltpu.CompilerParams(
            dimension_semantics=("parallel", "arbitrary"),
            vmem_limit_bytes=vmem_limit),
    )(adj_i8, er, el_t, feat_src, bias2d)

    return out.reshape(n, num_heads, out_feats)


# ---------------- pure-JAX reference (mirrors the PyTorch forward) -----------
def gat_conv_reference(x, w, attn_l, attn_r, adj, bias):
    n = x.shape[0]
    num_heads, out_feats = attn_l.shape
    feat = (x @ w).reshape(n, num_heads, out_feats)              # (N,H,F)
    el = jnp.sum(feat * attn_l[None], axis=-1)                   # (N,H)
    er = jnp.sum(feat * attn_r[None], axis=-1)                   # (N,H)
    e = el[None, :, :] + er[:, None, :]                          # (Ndst,Nsrc,H)
    e = jnp.where(e > 0, e, NEG_SLOPE * e)
    mask = adj[:, :, None] > 0
    e_masked = jnp.where(mask, e, _NEG_BIG)
    e_max = jnp.max(e_masked, axis=1, keepdims=True)
    p = jnp.exp(e_masked - e_max) * adj[:, :, None]
    a = p / jnp.sum(p, axis=1, keepdims=True)                    # (Ndst,Nsrc,H)
    rst = jnp.einsum('ijh,jhf->ihf', a, feat)                    # (N,H,F)
    return rst + bias.reshape(1, num_heads, out_feats)


# ---------------- deterministic parameter init (xavier_normal, gain=sqrt(2)) -
def _xavier_normal(key, shape, fan_in, fan_out, gain):
    std = gain * np.sqrt(2.0 / (fan_in + fan_out))
    return std * jax.random.normal(key, shape, jnp.float32)


def _make_graph(n):
    adj_np = np.zeros((n, n), np.int8)      # adj[dst, src]
    for i in range(n):
        adj_np[i, i] = 1                    # self loop (no 0-in-degree nodes)
        adj_np[(i + 1) % n, i] = 1          # ring edge i -> i+1
        adj_np[(i + 3) % n, i] = 1          # skip edge i -> i+3
    return jnp.asarray(adj_np)


def _run_case(seed, n, d_in, num_heads, out_feats, tile_m, tile_src):
    gain = float(np.sqrt(2.0))              # nn.init.calculate_gain('relu')
    key = jax.random.PRNGKey(seed)
    k_x, k_w, k_al, k_ar, k_b = jax.random.split(key, 5)

    x = jax.random.normal(k_x, (n, d_in), jnp.float32)
    w = _xavier_normal(k_w, (d_in, num_heads * out_feats),
                       fan_in=d_in, fan_out=num_heads * out_feats, gain=gain)
    attn_l = _xavier_normal(k_al, (num_heads, out_feats),
                            fan_in=num_heads * out_feats, fan_out=out_feats,
                            gain=gain)
    attn_r = _xavier_normal(k_ar, (num_heads, out_feats),
                            fan_in=num_heads * out_feats, fan_out=out_feats,
                            gain=gain)
    # Module initializes bias to 0; use a small nonzero value so the add path
    # is actually exercised (bias is a learnable parameter at forward time).
    bias = 0.1 * jax.random.normal(k_b, (num_heads * out_feats,), jnp.float32)
    adj = _make_graph(n)

    ref = gat_conv_reference(x, w, attn_l, attn_r, adj.astype(jnp.float32), bias)

    out_f32 = jax.block_until_ready(
        gat_conv_pallas(x, w, attn_l, attn_r, adj, bias,
                        tile_m=tile_m, tile_src=tile_src,
                        agg_dtype=jnp.float32))
    np.testing.assert_allclose(np.asarray(out_f32), np.asarray(ref),
                               rtol=1e-4, atol=1e-4)

    out_bf16 = jax.block_until_ready(
        gat_conv_pallas(x, w, attn_l, attn_r, adj, bias,
                        tile_m=tile_m, tile_src=tile_src,
                        agg_dtype=jnp.bfloat16))
    np.testing.assert_allclose(np.asarray(out_bf16), np.asarray(ref),
                               rtol=2e-2, atol=2e-2)


if __name__ == "__main__":
    # Case 1: small graph, single tile on both axes (N=16, D_in=32, H=4, F=8).
    _run_case(seed=0, n=16, d_in=32, num_heads=4, out_feats=8,
              tile_m=256, tile_src=512)
    # Case 2: exercises dst tiling, src tiling + online softmax, and the
    # ragged/padded edge handling (N=200 with 128-wide tiles on both axes).
    _run_case(seed=1, n=200, d_in=32, num_heads=4, out_feats=8,
              tile_m=128, tile_src=128)

    # TODO(synk): feat_drop / attn_drop are identity at the default p=0.0 and
    # are not materialized as PRNG masks; residual is disabled by the module's
    # default residual=False; edge_weight / get_attention paths not exercised.
    print("KERNEL_OK")
</pallas_src>

<mosaic_0001>
module attributes {stable_mosaic.version = 11 : i64} {
  func.func @_proj_kernel(%arg0: i32, %arg1: memref<16x32xf32, #tpu.memory_space<vmem>>, %arg2: memref<32x32xf32, #tpu.memory_space<vmem>>, %arg3: memref<32x128xf32, #tpu.memory_space<vmem>>, %arg4: memref<16x32xf32, #tpu.memory_space<vmem>>, %arg5: memref<16x128xf32, #tpu.memory_space<vmem>>) attributes {dimension_semantics = [#tpu.dimension_semantics<parallel>], iteration_bounds = array<i64: 1>, scalar_prefetch = 0 : i64, scratch_operands = 0 : i64, tpu.core_type = #tpu.core_type<tc>, window_params = [{transform_indices = @transform_0, window_bounds = array<i64: 16, 32>}, {pipeline_mode = #tpu.pipeline_mode<synchronous>, transform_indices = @transform_1, window_bounds = array<i64: 32, 32>}, {pipeline_mode = #tpu.pipeline_mode<synchronous>, transform_indices = @transform_2, window_bounds = array<i64: 32, 128>}, {transform_indices = @transform_3, window_bounds = array<i64: 16, 32>}, {transform_indices = @transform_4, window_bounds = array<i64: 16, 128>}]} {
    %c0 = arith.constant 0 : index
    %c0_0 = arith.constant 0 : index
    %0 = vector.load %arg1[%c0, %c0_0] : memref<16x32xf32, #tpu.memory_space<vmem>>, vector<16x32xf32>
    %c0_1 = arith.constant 0 : index
    %c0_2 = arith.constant 0 : index
    %1 = vector.load %arg2[%c0_1, %c0_2] : memref<32x32xf32, #tpu.memory_space<vmem>>, vector<32x32xf32>
    %cst = arith.constant dense<0.000000e+00> : vector<16x32xf32>
    %2 = tpu.matmul %0, %1, %cst {dimension_numbers = #tpu.dot_dimension_numbers<[1], [0], [0], [1], [0, 0, 1, 1], [], []>} : vector<16x32xf32>, vector<32x32xf32>, vector<16x32xf32> -> vector<16x32xf32>
    %c0_3 = arith.constant 0 : index
    %c0_4 = arith.constant 0 : index
    %3 = vector.load %arg4[%c0_3, %c0_4] : memref<16x32xf32, #tpu.memory_space<vmem>>, vector<16x32xf32>
    tpu.vector_store %arg4[%c0_3, %c0_4], %2 {strides = array<i32>} : memref<16x32xf32, #tpu.memory_space<vmem>>, vector<16x32xf32>,
    %c0_5 = arith.constant 0 : index
    %c0_6 = arith.constant 0 : index
    %4 = vector.load %arg3[%c0_5, %c0_6] : memref<32x128xf32, #tpu.memory_space<vmem>>, vector<32x128xf32>
    %cst_7 = arith.constant dense<0.000000e+00> : vector<16x128xf32>
    %5 = tpu.matmul %2, %4, %cst_7 {dimension_numbers = #tpu.dot_dimension_numbers<[1], [0], [0], [1], [0, 0, 1, 1], [], []>} : vector<16x32xf32>, vector<32x128xf32>, vector<16x128xf32> -> vector<16x128xf32>
    %c0_8 = arith.constant 0 : index
    %c0_9 = arith.constant 0 : index
    %6 = vector.load %arg5[%c0_8, %c0_9] : memref<16x128xf32, #tpu.memory_space<vmem>>, vector<16x128xf32>
    tpu.vector_store %arg5[%c0_8, %c0_9], %5 {strides = array<i32>} : memref<16x128xf32, #tpu.memory_space<vmem>>, vector<16x128xf32>,
    return
  }
  func.func @transform_0(%arg0: i32) -> (i32, i32) {
    %c0_i32 = arith.constant 0 : i32
    %c0_i32_0 = arith.constant 0 : i32
    return %arg0, %c0_i32 : i32, i32
  }
  func.func @transform_1(%arg0: i32) -> (i32, i32) {
    %c0_i32 = arith.constant 0 : i32
    %c0_i32_0 = arith.constant 0 : i32
    %c0_i32_1 = arith.constant 0 : i32
    return %c0_i32, %c0_i32_0 : i32, i32
  }
  func.func @transform_2(%arg0: i32) -> (i32, i32) {
    %c0_i32 = arith.constant 0 : i32
    %c0_i32_0 = arith.constant 0 : i32
    %c0_i32_1 = arith.constant 0 : i32
    return %c0_i32, %c0_i32_0 : i32, i32
  }
  func.func @transform_3(%arg0: i32) -> (i32, i32) {
    %c0_i32 = arith.constant 0 : i32
    %c0_i32_0 = arith.constant 0 : i32
    return %arg0, %c0_i32 : i32, i32
  }
  func.func @transform_4(%arg0: i32) -> (i32, i32) {
    %c0_i32 = arith.constant 0 : i32
    %c0_i32_0 = arith.constant 0 : i32
    return %arg0, %c0_i32 : i32, i32
  }
}

</mosaic_0001>

<llo_original>
// kernel: tpu_custom_call.1
$region0: #{tpu_custom_call.1}
  #allocation0 [shape = 'u32[]', space=smem, size = 0x4, offset = 0x4, fixed_abs, tag = 'smem constant byte address 0x4 - core index']
  #allocation1 [shape = 'u32[144,128]{1,0:T(1,128)}', space=vmem, size = 0x12000, scoped, tag = 'internal scratch']
  %s0 = inlined_call_operand.hbm [shape: f32[16,32], index: 0, kind: input, shape index: {}]
  %s1 = inlined_call_operand.hbm [shape: f32[32,32], index: 1, kind: input, shape index: {}]
  %s2 = inlined_call_operand.hbm [shape: f32[32,128], index: 2, kind: input, shape index: {}]
  %s3 = inlined_call_operand.hbm [shape: f32[16,32], index: 3, kind: output, shape index: {0}]
  %s4 = inlined_call_operand.hbm [shape: f32[16,128], index: 4, kind: output, shape index: {1}]
  %5 = xla_tuple %s3, %s4
  %s6 = sld [smem:[#allocation0]]
  $region42: #{tpu_custom_call.1} parent=0
    _
  %s8 = ssub.s32 1, %s6
  %s9 = scalar_select 0, %s8, %s6
  $region1: #{tpu_custom_call.1} parent=0
    #allocation2 [shape = 'u8[8192]{0}', space=vmem, size = 0x2000, scoped, tag = 'input window, operand 0, single buffered']
    #allocation3 [shape = 's32[1]{0}', space=sflag, size = 0x4, scoped, tag = 'scoped memory for tpu_custom_call.1']
    #allocation4 [shape = 's32[1]{0}', space=sflag, size = 0x4, scoped, tag = 'scoped memory for tpu_custom_call.1']
    #allocation5 [shape = 'u8[16384]{0}', space=vmem, size = 0x4000, scoped, tag = 'input window, operand 1, single buffered']
    #allocation6 [shape = 's32[1]{0}', space=sflag, size = 0x4, scoped, tag = 'scoped memory for tpu_custom_call.1']
    #allocation7 [shape = 'u8[16384]{0}', space=vmem, size = 0x4000, scoped, tag = 'input window, operand 2, single buffered']
    #allocation8 [shape = 'u8[8192]{0}', space=vmem, size = 0x2000, scoped, tag = 'output window, operand 0, single buffered']
    #allocation9 [shape = 'u8[8192]{0}', space=vmem, size = 0x2000, scoped, tag = 'output window, operand 1, single buffered']
    #allocation10 [shape = 's32[1]{0}', space=sflag, size = 0x4, scoped, tag = 'scoped memory for tpu_custom_call.1']
    %10 = vsyncpa [#allocation3], 0
    %11 = vsyncpa [#allocation6], 0
    %12 = vsyncpa [#allocation4], 0
    %13 = vsyncpa [#allocation10], 0
    // Predicated region
    $region2: #{tpu_custom_call.1} parent=1 // pred_check
      _
    $region3: #{tpu_custom_call.1} parent=1 // pred_check_branch
      %15 = sbr.rel (0) target = $region5
    $region4: #{tpu_custom_call.1} parent=1 // pred_region
      %s17 = ssub.s32 256, 256
      %18 = vsyncadd [#allocation3], %s17
      %s19 = sshll.u32 [#allocation2], 4
      %s20 = int_to_ptr.vmem [resolvable:$true] %s19
      %25 = dma.hbm_to_vmem [thread:$0]  %s0, 256, %s20, [#allocation3], 128, 128, 8
    $region5: #{tpu_custom_call.1} parent=1 // pred_fallthru
      _
    // Predicated region
    $region6: #{tpu_custom_call.1} parent=1 // pred_check
      _
    $region7: #{tpu_custom_call.1} parent=1 // pred_check_branch
      %27 = sbr.rel (0) target = $region9
    $region8: #{tpu_custom_call.1} parent=1 // pred_region
      %s29 = ssub.s32 512, 512
      %30 = vsyncadd [#allocation6], %s29
      %s31 = sshll.u32 [#allocation5], 4
      %s32 = int_to_ptr.vmem [resolvable:$true] %s31
      %37 = dma.hbm_to_vmem [thread:$0]  %s1, 512, %s32, [#allocation6], 128, 128, 8
    $region9: #{tpu_custom_call.1} parent=1 // pred_fallthru
      _
    // Predicated region
    $region10: #{tpu_custom_call.1} parent=1 // pred_check
      _
    $region11: #{tpu_custom_call.1} parent=1 // pred_check_branch
      %39 = sbr.rel (0) target = $region13
    $region12: #{tpu_custom_call.1} parent=1 // pred_region
      %s41 = ssub.s32 512, 512
      %42 = vsyncadd [#allocation6], %s41
      %s43 = sshll.u32 [#allocation7], 4
      %s44 = int_to_ptr.vmem [resolvable:$true] %s43
      %49 = dma.hbm_to_vmem [thread:$0]  %s2, 512, %s44, [#allocation6], 128, 128, 8
    $region13: #{tpu_custom_call.1} parent=1 // pred_fallthru
      _
    // Predicated region
    $region14: #{tpu_custom_call.1} parent=1 // pred_check
      _
    $region15: #{tpu_custom_call.1} parent=1 // pred_check_branch
      %51 = sbr.rel (0) target = $region17
    $region16: #{tpu_custom_call.1} parent=1 // pred_region
      %52 = dma.done [#allocation3], 256
    $region17: #{tpu_custom_call.1} parent=1 // pred_fallthru
      _
    // Predicated region
    $region18: #{tpu_custom_call.1} parent=1 // pred_check
      _
    $region19: #{tpu_custom_call.1} parent=1 // pred_check_branch
      %54 = sbr.rel (0) target = $region21
    $region20: #{tpu_custom_call.1} parent=1 // pred_region
      %55 = dma.done [#allocation6], 512
    $region21: #{tpu_custom_call.1} parent=1 // pred_fallthru
      _
    // Predicated region
    $region22: #{tpu_custom_call.1} parent=1 // pred_check
      _
    $region23: #{tpu_custom_call.1} parent=1 // pred_check_branch
      %57 = sbr.rel (0) target = $region25
    $region24: #{tpu_custom_call.1} parent=1 // pred_region
      %58 = dma.done [#allocation6], 512
    $region25: #{tpu_custom_call.1} parent=1 // pred_fallthru
      _
    %v59 = vld [vmem:[#allocation2] sm:$0xff]
    %v60 = vld [vmem:[#allocation2 + $0x8] sm:$0xff]
    %v61 = vld [vmem:[#allocation5] sm:$0xff]
    %v62 = vld [vmem:[#allocation5 + $0x8] sm:$0xff]
    %v63 = vld [vmem:[#allocation5 + $0x10] sm:$0xff]
    %v64 = vld [vmem:[#allocation5 + $0x18] sm:$0xff]
    %vm65 = vcmask 261120
    %v67 = vsel %vm65, %v59, 0
    %v70 = vsel %vm65, %v60, 0
    %72 = vmatprep.subr.mxu0 0.0
    %73 = vmatpush1.msra.mxu0 %v61
    %74 = vmatprep.subr.mxu0 0.0
    %75 = vmatpush1.msra.mxu0 %v62
    %76 = vmatprep.subr.mxu0 0.0
    %77 = vmatpush1.msra.mxu0 %v63
    %78 = vmatprep.subr.mxu0 0.0
    %79 = vmatpush1.msra.mxu0 %v64
    %80 = vmatprep.subr.mxu0 0.0
    %81 = vmatpush1.msra.mxu0 0.0
    %82 = vmatprep.subr.mxu0 0.0
    %83 = vmatpush1.msra.mxu0 0.0
    %84 = vmatprep.subr.mxu0 0.0
    %85 = vmatpush1.msra.mxu0 0.0
    %86 = vmatprep.subr.mxu0 0.0
    %87 = vmatpush1.msra.mxu0 0.0
    %88 = vmatprep.subr.mxu0 0.0
    %89 = vmatpush1.msra.mxu0 0.0
    %90 = vmatprep.subr.mxu0 0.0
    %91 = vmatpush1.msra.mxu0 0.0
    %92 = vmatprep.subr.mxu0 0.0
    %93 = vmatpush1.msra.mxu0 0.0
    %94 = vmatprep.subr.mxu0 0.0
    %95 = vmatpush1.msra.mxu0 0.0
    %96 = vmatprep.subr.mxu0 0.0
    %97 = vmatpush1.msra.mxu0 0.0
    %98 = vmatprep.subr.mxu0 0.0
    %99 = vmatpush1.msra.mxu0 0.0
    %100 = vmatprep.subr.mxu0 0.0
    %101 = vmatpush1.msra.mxu0 0.0
    %102 = vmatprep.subr.mxu0 0.0
    %103 = vmatpush1.msra.mxu0 0.0
    %104 = vmatprep.subr.mxu0 0.0
    %105 = vmatpush1.msra.mxu0 0.0
    %106 = vmatprep.subr.mxu0 0.0
    %107 = vmatpush1.msra.mxu0 0.0
    %108 = vmatprep.subr.mxu0 0.0
    %109 = vmatpush1.msra.mxu0 0.0
    %110 = vmatprep.subr.mxu0 0.0
    %111 = vmatpush1.msra.mxu0 0.0
    %112 = vmatprep.subr.mxu0 0.0
    %113 = vmatpush1.msra.mxu0 0.0
    %114 = vmatprep.subr.mxu0 0.0
    %115 = vmatpush1.msra.mxu0 0.0
    %116 = vmatprep.subr.mxu0 0.0
    %117 = vmatpush1.msra.mxu0 0.0
    %118 = vmatprep.subr.mxu0 0.0
    %119 = vmatpush1.msra.mxu0 0.0
    %120 = vmatprep.subr.mxu0 0.0
    %121 = vmatpush1.msra.mxu0 0.0
    %122 = vmatprep.subr.mxu0 0.0
    %123 = vmatpush1.msra.mxu0 0.0
    %124 = vmatprep.subr.mxu0 0.0
    %125 = vmatpush1.msra.mxu0 0.0
    %126 = vmatprep.subr.mxu0 0.0
    %127 = vmatpush1.msra.mxu0 0.0
    %128 = vmatprep.subr.mxu0 0.0
    %129 = vmatpush1.msra.mxu0 0.0
    %130 = vmatprep.subr.mxu0 0.0
    %131 = vmatpush1.msra.mxu0 0.0
    %132 = vmatprep.subr.mxu0 0.0
    %133 = vmatpush1.msra.mxu0 0.0
    %134 = vmatprep.subr.mxu0 0.0
    %135 = vmatpush1.msra.mxu0 0.0
    %136 = vmatprep.mubr.f32.mxu0 0.0
    %137 = vmatmul.mubr.f32.gmra.mrb[0].mxu0 %v67
    %v138 = vpop.f32.mrb[0].mxu0
    %v139 = vadd.f32 0.0, %v138
    %v140 = vpop.f32.mrb[0].mxu0
    %141 = vmatprep.mubr.f32.mxu0 0.0
    %142 = vmatmul.mubr.f32.gmra.mrb[0].mxu0 %v70
    %v143 = vpop.f32.mrb[0].mxu0
    %v144 = vadd.f32 0.0, %v143
    %v145 = vpop.f32.mrb[0].mxu0
    %146 = vdwg.mxu0
    %147 = vst.msk [vmem:[#allocation8] sm:$0xff] %vm65, %v139
    %148 = vst.msk [vmem:[#allocation8 + $0x8] sm:$0xff] %vm65, %v144
    %v149 = vld [vmem:[#allocation7] sm:$0xff]
    %v150 = vld [vmem:[#allocation7 + $0x8] sm:$0xff]
    %v151 = vld [vmem:[#allocation7 + $0x10] sm:$0xff]
    %v152 = vld [vmem:[#allocation7 + $0x18] sm:$0xff]
    %v154 = vsel %vm65, %v139, 0
    %v157 = vsel %vm65, %v144, 0
    %159 = vmatprep.subr.mxu0 0.0
    %160 = vmatpush1.msra.mxu0 %v149
    %161 = vmatprep.subr.mxu0 0.0
    %162 = vmatpush1.msra.mxu0 %v150
    %163 = vmatprep.subr.mxu0 0.0
    %164 = vmatpush1.msra.mxu0 %v151
    %165 = vmatprep.subr.mxu0 0.0
    %166 = vmatpush1.msra.mxu0 %v152
    %167 = vmatprep.subr.mxu0 0.0
    %168 = vmatpush1.msra.mxu0 0.0
    %169 = vmatprep.subr.mxu0 0.0
    %170 = vmatpush1.msra.mxu0 0.0
    %171 = vmatprep.subr.mxu0 0.0
    %172 = vmatpush1.msra.mxu0 0.0
    %173 = vmatprep.subr.mxu0 0.0
    %174 = vmatpush1.msra.mxu0 0.0
    %175 = vmatprep.subr.mxu0 0.0
    %176 = vmatpush1.msra.mxu0 0.0
    %177 = vmatprep.subr.mxu0 0.0
    %178 = vmatpush1.msra.mxu0 0.0
    %179 = vmatprep.subr.mxu0 0.0
    %180 = vmatpush1.msra.mxu0 0.0
    %181 = vmatprep.subr.mxu0 0.0
    %182 = vmatpush1.msra.mxu0 0.0
    %183 = vmatprep.subr.mxu0 0.0
    %184 = vmatpush1.msra.mxu0 0.0
    %185 = vmatprep.subr.mxu0 0.0
    %186 = vmatpush1.msra.mxu0 0.0
    %187 = vmatprep.subr.mxu0 0.0
    %188 = vmatpush1.msra.mxu0 0.0
    %189 = vmatprep.subr.mxu0 0.0
    %190 = vmatpush1.msra.mxu0 0.0
    %191 = vmatprep.subr.mxu0 0.0
    %192 = vmatpush1.msra.mxu0 0.0
    %193 = vmatprep.subr.mxu0 0.0
    %194 = vmatpush1.msra.mxu0 0.0
    %195 = vmatprep.subr.mxu0 0.0
    %196 = vmatpush1.msra.mxu0 0.0
    %197 = vmatprep.subr.mxu0 0.0
    %198 = vmatpush1.msra.mxu0 0.0
    %199 = vmatprep.subr.mxu0 0.0
    %200 = vmatpush1.msra.mxu0 0.0
    %201 = vmatprep.subr.mxu0 0.0
    %202 = vmatpush1.msra.mxu0 0.0
    %203 = vmatprep.subr.mxu0 0.0
    %204 = vmatpush1.msra.mxu0 0.0
    %205 = vmatprep.subr.mxu0 0.0
    %206 = vmatpush1.msra.mxu0 0.0
    %207 = vmatprep.subr.mxu0 0.0
    %208 = vmatpush1.msra.mxu0 0.0
    %209 = vmatprep.subr.mxu0 0.0
    %210 = vmatpush1.msra.mxu0 0.0
    %211 = vmatprep.subr.mxu0 0.0
    %212 = vmatpush1.msra.mxu0 0.0
    %213 = vmatprep.subr.mxu0 0.0
    %214 = vmatpush1.msra.mxu0 0.0
    %215 = vmatprep.subr.mxu0 0.0
    %216 = vmatpush1.msra.mxu0 0.0
    %217 = vmatprep.subr.mxu0 0.0
    %218 = vmatpush1.msra.mxu0 0.0
    %219 = vmatprep.subr.mxu0 0.0
    %220 = vmatpush1.msra.mxu0 0.0
    %221 = vmatprep.subr.mxu0 0.0
    %222 = vmatpush1.msra.mxu0 0.0
    %223 = vmatprep.mubr.f32.mxu0 0.0
    %224 = vmatmul.mubr.f32.gmra.mrb[0].mxu0 %v154
    %v225 = vpop.f32.mrb[0].mxu0
    %v226 = vadd.f32 0.0, %v225
    %v227 = vpop.f32.mrb[0].mxu0
    %228 = vmatprep.mubr.f32.mxu0 0.0
    %229 = vmatmul.mubr.f32.gmra.mrb[0].mxu0 %v157
    %v230 = vpop.f32.mrb[0].mxu0
    %v231 = vadd.f32 0.0, %v230
    %v232 = vpop.f32.mrb[0].mxu0
    %233 = vdwg.mxu0
    %234 = vst [vmem:[#allocation9] sm:$0xff] %v226
    %235 = vst [vmem:[#allocation9 + $0x8] sm:$0xff] %v231
    // Predicated region
    $region26: #{tpu_custom_call.1} parent=1 // pred_check
      _
    $region27: #{tpu_custom_call.1} parent=1 // pred_check_branch
      %237 = sbr.rel (0) target = $region29
    $region28: #{tpu_custom_call.1} parent=1 // pred_region
      %s239 = ssub.s32 256, 256
      %240 = vsyncadd [#allocation4], %s239
      %s241 = sshll.u32 [#allocation8], 4
      %s242 = int_to_ptr.vmem [resolvable:$true] %s241
      %247 = dma.vmem_to_hbm [thread:$0]  %s242, 256, %s3, [#allocation4], 128, 128, 8
    $region29: #{tpu_custom_call.1} parent=1 // pred_fallthru
      _
    // Predicated region
    $region30: #{tpu_custom_call.1} parent=1 // pred_check
      _
    $region31: #{tpu_custom_call.1} parent=1 // pred_check_branch
      %249 = sbr.rel (0) target = $region33
    $region32: #{tpu_custom_call.1} parent=1 // pred_region
      %s251 = ssub.s32 256, 256
      %252 = vsyncadd [#allocation10], %s251
      %s253 = sshll.u32 [#allocation9], 4
      %s254 = int_to_ptr.vmem [resolvable:$true] %s253
      %259 = dma.vmem_to_hbm [thread:$0]  %s254, 256, %s4, [#allocation10], 128, 128, 8
    $region33: #{tpu_custom_call.1} parent=1 // pred_fallthru
      _
    // Predicated region
    $region34: #{tpu_custom_call.1} parent=1 // pred_check
      _
    $region35: #{tpu_custom_call.1} parent=1 // pred_check_branch
      %261 = sbr.rel (0) target = $region37
    $region36: #{tpu_custom_call.1} parent=1 // pred_region
      %262 = dma.done [#allocation4], 256
    $region37: #{tpu_custom_call.1} parent=1 // pred_fallthru
      _
    // Predicated region
    $region38: #{tpu_custom_call.1} parent=1 // pred_check
      _
    $region39: #{tpu_custom_call.1} parent=1 // pred_check_branch
      %264 = sbr.rel (0) target = $region41
    $region40: #{tpu_custom_call.1} parent=1 // pred_region
      %265 = dma.done [#allocation10], 256
    $region41: #{tpu_custom_call.1} parent=1 // pred_fallthru
      _
    %266 = vsyncpa [#allocation3], 1
    %267 = vsyncpa [#allocation6], 1
    %268 = vsyncpa [#allocation4], 1
    %269 = vsyncpa [#allocation10], 1

</llo_original>
